<compile_context>
chip_gen: v7x
topology: tpu7x:2x2x1
jax: 0.10.0
libtpu: 0.0.40
codegen_flags: <defaults>
</compile_context>

<pallas_src>
import jax
import jax.numpy as jnp
from jax.experimental import pallas as pl
from jax.experimental.pallas import tpu as pltpu


# ------------------------------ helpers -------------------------------------

def _round_up(x, m):
    return ((x + m - 1) // m) * m


def _pad2(a, rows, cols):
    return jnp.pad(a, ((0, rows - a.shape[0]), (0, cols - a.shape[1])))


def _pad1(v, n):
    return jnp.pad(v, (0, n - v.shape[0]))


def _vmem_capacity_bytes():
    try:
        return int(pltpu.get_tpu_info().vmem_capacity_bytes)
    except Exception:
        return 64 * 1024 * 1024      # conservative (v7x-sized) fallback


_VMEM_CAP = _vmem_capacity_bytes()
_BIG_VMEM = _VMEM_CAP >= 100 * 1024 * 1024          # v5e / v6e (128 MiB)
DEFAULT_FUSE_THRESHOLD = 4096 if _BIG_VMEM else 2048  # v7x (64 MiB) stays lower
FUSED_VMEM_LIMIT = (96 if _BIG_VMEM else 40) * 1024 * 1024
TILED_VMEM_LIMIT = 48 * 1024 * 1024                  # safe on every generation


def _choose_tiles(n):
    """(n_padded, tm, tk) for the tiled propagation path."""
    n_pad = _round_up(max(n, 512), 512)
    tk = max(t for t in (2048, 1024, 512) if n_pad % t == 0)
    tm_opts = [t for t in (1024, 512) if n_pad % t == 0 and n_pad // t >= 2]
    tm = max(tm_opts) if tm_opts else 512            # keep >=2 row blocks (dual-TC)
    return n_pad, tm, tk


# --------------------------- Pallas kernels ---------------------------------

def _fused_encoder_kernel(a_ref, x_ref, dinv_ref, w1_ref, b1_ref, w2_ref,
                          b2_ref, o_ref):
    """Whole encoder for small graphs; everything VMEM-resident, one launch.

    a: (Np,Np) bf16 raw (A+I);  dinv: (Np,1) f32 = D^{-1/2};  x: (Np,Fin) bf16;
    w1: (Fin,Hp) bf16; b1: (1,Hp) f32; w2=[Wmu|Wls]: (Hp,F2p) bf16; b2: (1,F2p) f32.
    """
    dinv = dinv_ref[...]
    xw1 = jnp.dot(x_ref[...], w1_ref[...],
                  preferred_element_type=jnp.float32) * dinv       # fold dinv[k]
    h = jnp.dot(a_ref[...], xw1.astype(jnp.bfloat16),
                preferred_element_type=jnp.float32) * dinv          # fold dinv[i]
    h = jnp.maximum(h + b1_ref[...], 0.0)                           # f32 epilogue
    xw2 = jnp.dot(h.astype(jnp.bfloat16), w2_ref[...],
                  preferred_element_type=jnp.float32) * dinv
    out = jnp.dot(a_ref[...], xw2.astype(jnp.bfloat16),
                  preferred_element_type=jnp.float32) * dinv
    o_ref[...] = (out + b2_ref[...]).astype(o_ref.dtype)


def _layer1_kernel(a_ref, x_ref, dk_ref, di_ref, w1_ref, b1_ref, w2_ref,
                   z_ref, acc_ref):
    """Layer 1 + projection, fully fused:

      h[i] = relu( dinv[i] * sum_k A[i,k] @ (dinv[k] * X[k] @ W1) + b1 )
      z[i] = dinv[i] * (h[i] @ [Wmu|Wls])        (bf16 output, fed to layer 2)

    The (tk,Fin)@(Fin,Hp) matmul is recomputed per row block (Fin is tiny), so
    neither XW1 nor h ever touches HBM.
    """
    k = pl.program_id(1)

    @pl.when(k == 0)
    def _():
        acc_ref[...] = jnp.zeros_like(acc_ref)

    xw = jnp.dot(x_ref[...], w1_ref[...], preferred_element_type=jnp.float32)
    xw = (xw * dk_ref[...]).astype(jnp.bfloat16)            # dinv on the k side
    acc_ref[...] += jnp.dot(a_ref[...], xw, preferred_element_type=jnp.float32)

    @pl.when(k == pl.num_programs(1) - 1)
    def _():
        h = jnp.maximum(acc_ref[...] * di_ref[...] + b1_ref[...], 0.0)
        z = jnp.dot(h.astype(jnp.bfloat16), w2_ref[...],
                    preferred_element_type=jnp.float32) * di_ref[...]
        z_ref[...] = z.astype(z_ref.dtype)


def _layer2_kernel(a_ref, z_ref, di_ref, b2_ref, o_ref):
    """out[i] = dinv[i] * sum_k A[i,k] @ z[k] + b2.

    f32 output block is resident across k -> accumulate directly (no scratch).
    """
    k = pl.program_id(1)

    @pl.when(k == 0)
    def _():
        o_ref[...] = jnp.zeros_like(o_ref)

    o_ref[...] += jnp.dot(a_ref[...], z_ref[...],
                          preferred_element_type=jnp.float32)

    @pl.when(k == pl.num_programs(1) - 1)
    def _():
        o_ref[...] = o_ref[...] * di_ref[...] + b2_ref[...]


# --------------------------- Pallas wrappers --------------------------------

def _fused_encoder_call(a_bf, x_bf, dinv, w1_p, b1_p, w2_p, b2_p):
    n_pad = a_bf.shape[0]
    f2_pad = w2_p.shape[1]
    vmem = pl.BlockSpec(memory_space=pltpu.MemorySpace.VMEM)
    return pl.pallas_call(
        _fused_encoder_kernel,
        out_shape=jax.ShapeDtypeStruct((n_pad, f2_pad), jnp.float32),
        in_specs=[vmem] * 7,
        out_specs=vmem,
        compiler_params=pltpu.CompilerParams(vmem_limit_bytes=FUSED_VMEM_LIMIT),
    )(a_bf, x_bf, dinv, w1_p, b1_p, w2_p, b2_p)


def layer1_propagate(a_bf, x_bf, dinv, w1, b1, w2, *, tm, tk):
    n_pad = a_bf.shape[0]
    fin = x_bf.shape[1]
    hp = w1.shape[1]
    f2p = w2.shape[1]
    return pl.pallas_call(
        _layer1_kernel,
        out_shape=jax.ShapeDtypeStruct((n_pad, f2p), jnp.bfloat16),
        grid_spec=pltpu.PrefetchScalarGridSpec(
            num_scalar_prefetch=0,
            grid=(n_pad // tm, n_pad // tk),                    # K last
            in_specs=[
                pl.BlockSpec((tm, tk), lambda i, k: (i, k)),    # A (raw A+I)
                pl.BlockSpec((tk, fin), lambda i, k: (k, 0)),   # X
                pl.BlockSpec((tk, 1), lambda i, k: (k, 0)),     # dinv[k-block]
                pl.BlockSpec((tm, 1), lambda i, k: (i, 0)),     # dinv[i-block]
                pl.BlockSpec((fin, hp), lambda i, k: (0, 0)),   # W1 (resident)
                pl.BlockSpec((1, hp), lambda i, k: (0, 0)),     # b1
                pl.BlockSpec((hp, f2p), lambda i, k: (0, 0)),   # [Wmu|Wls] (resident)
            ],
            out_specs=pl.BlockSpec((tm, f2p), lambda i, k: (i, 0)),
            scratch_shapes=[pltpu.VMEM((tm, hp), jnp.float32)]),
        compiler_params=pltpu.CompilerParams(
            dimension_semantics=("parallel", "arbitrary"),
            vmem_limit_bytes=TILED_VMEM_LIMIT),
    )(a_bf, x_bf, dinv, dinv, w1, b1, w2)


def layer2_propagate(a_bf, z_bf, dinv, b2, *, tm, tk):
    n_pad = a_bf.shape[0]
    f2p = z_bf.shape[1]
    return pl.pallas_call(
        _layer2_kernel,
        out_shape=jax.ShapeDtypeStruct((n_pad, f2p), jnp.float32),
        grid_spec=pltpu.PrefetchScalarGridSpec(
            num_scalar_prefetch=0,
            grid=(n_pad // tm, n_pad // tk),                    # K last
            in_specs=[
                pl.BlockSpec((tm, tk), lambda i, k: (i, k)),    # A (raw A+I)
                pl.BlockSpec((tk, f2p), lambda i, k: (k, 0)),   # z
                pl.BlockSpec((tm, 1), lambda i, k: (i, 0)),     # dinv[i-block]
                pl.BlockSpec((1, f2p), lambda i, k: (0, 0)),    # b2
            ],
            out_specs=pl.BlockSpec((tm, f2p), lambda i, k: (i, 0))),
        compiler_params=pltpu.CompilerParams(
            dimension_semantics=("parallel", "arbitrary"),
            vmem_limit_bytes=TILED_VMEM_LIMIT),
    )(a_bf, z_bf, dinv, b2)


# ------------------------------ JAX glue ------------------------------------

def build_adjacency_and_dinv(edge_index, edge_weight, num_nodes, n_pad):
    """Raw (A + I) scattered directly into a pre-padded (n_pad, n_pad) bf16
    buffer, plus D^{-1/2} from an O(E) segment-sum (no dense reduction).

    Matches PyG gcn_norm: self-loop weight 1, deg from incoming summed weights.
    Padded rows/cols of A and padded dinv entries are exactly zero."""
    src, dst = edge_index[0], edge_index[1]
    loops = jnp.arange(num_nodes, dtype=edge_index.dtype)
    src_all = jnp.concatenate([src, loops])
    dst_all = jnp.concatenate([dst, loops])
    w_all = jnp.concatenate([edge_weight.astype(jnp.float32),
                             jnp.ones((num_nodes,), jnp.float32)])
    # message passing out[dst] += w * x[src]  ->  A[dst, src] = w  (duplicates sum)
    a = jnp.zeros((n_pad, n_pad), jnp.bfloat16).at[dst_all, src_all].add(
        w_all.astype(jnp.bfloat16))
    deg = jnp.zeros((n_pad,), jnp.float32).at[dst_all].add(w_all)   # O(E)
    dinv = jnp.where(deg > 0, jax.lax.rsqrt(deg), 0.0)
    return a, dinv.reshape(n_pad, 1)


def init_params(key, in_channels, out_channels):
    """Glorot-uniform weights, zero biases (PyG GCNConv defaults)."""
    hidden = 2 * out_channels

    def glorot(k, fin, fout):
        s = jnp.sqrt(6.0 / (fin + fout))
        return jax.random.uniform(k, (fin, fout), jnp.float32, -s, s)

    k1, k2, k3 = jax.random.split(key, 3)
    return {
        "w1": glorot(k1, in_channels, hidden),
        "b1": jnp.zeros((hidden,), jnp.float32),
        "w_mu": glorot(k2, hidden, out_channels),
        "b_mu": jnp.zeros((out_channels,), jnp.float32),
        "w_ls": glorot(k3, hidden, out_channels),
        "b_ls": jnp.zeros((out_channels,), jnp.float32),
    }


def variational_gcn_encoder(params, x, edge_index, edge_weight, *,
                            fuse_threshold=None):
    if fuse_threshold is None:
        fuse_threshold = DEFAULT_FUSE_THRESHOLD

    n, in_ch = x.shape
    hidden = params["w1"].shape[1]
    out_ch = params["w_mu"].shape[1]
    f2 = 2 * out_ch

    # Pad output feature dims to a multiple of 128 (lane-dense stores).
    h_pad = _round_up(hidden, 128)
    f2_pad = _round_up(f2, 128)

    w1_p = _pad2(params["w1"], in_ch, h_pad).astype(jnp.bfloat16)
    b1_p = _pad1(params["b1"], h_pad).reshape(1, h_pad)                 # f32
    w2 = jnp.concatenate([params["w_mu"], params["w_ls"]], axis=1)      # fused mu|ls
    b2 = jnp.concatenate([params["b_mu"], params["b_ls"]])
    w2_p = _pad2(w2, h_pad, f2_pad).astype(jnp.bfloat16)
    b2_p = _pad1(b2, f2_pad).reshape(1, f2_pad)                         # f32

    if n <= fuse_threshold:
        # Small/medium graph: single fused pallas_call, A read from HBM once.
        n_pad = _round_up(n, 8)
        a_bf, dinv = build_adjacency_and_dinv(edge_index, edge_weight, n, n_pad)
        x_bf = _pad2(x.astype(jnp.bfloat16), n_pad, in_ch)
        out = _fused_encoder_call(a_bf, x_bf, dinv, w1_p, b1_p, w2_p, b2_p)
    else:
        # Large graph: two tiled propagations; A streamed exactly twice, no
        # intermediate (XW1 / h) ever hits HBM.
        n_pad, tm, tk = _choose_tiles(n)
        a_bf, dinv = build_adjacency_and_dinv(edge_index, edge_weight, n, n_pad)
        x_bf = _pad2(x.astype(jnp.bfloat16), n_pad, in_ch)
        z = layer1_propagate(a_bf, x_bf, dinv, w1_p, b1_p, w2_p, tm=tm, tk=tk)
        out = layer2_propagate(a_bf, z, dinv, b2_p, tm=tm, tk=tk)

    out = out[:n, :f2]
    return out[:, :out_ch], out[:, out_ch:]


# ------------------------------ reference ------------------------------------

def reference_encoder(params, x, edge_index, edge_weight, num_nodes):
    """Pure-JAX f32 reference matching PyG GCNConv semantics."""
    src, dst = edge_index[0], edge_index[1]
    loops = jnp.arange(num_nodes, dtype=edge_index.dtype)
    src_all = jnp.concatenate([src, loops])
    dst_all = jnp.concatenate([dst, loops])
    w_all = jnp.concatenate([edge_weight.astype(jnp.float32),
                             jnp.ones((num_nodes,), jnp.float32)])
    a = jnp.zeros((num_nodes, num_nodes), jnp.float32).at[dst_all, src_all].add(w_all)
    deg = a.sum(axis=1)
    dinv = jnp.where(deg > 0, jax.lax.rsqrt(deg), 0.0)
    a_hat = dinv[:, None] * a * dinv[None, :]
    h = jnp.maximum(a_hat @ (x @ params["w1"]) + params["b1"], 0.0)
    mu = a_hat @ (h @ params["w_mu"]) + params["b_mu"]
    ls = a_hat @ (h @ params["w_ls"]) + params["b_ls"]
    return mu, ls


# --------------------------------- main --------------------------------------

if __name__ == "__main__":
    key = jax.random.PRNGKey(0)
    k_x, k_w, k_ew = jax.random.split(key, 3)

    num_nodes = 16
    in_channels = 8
    out_channels = 8          # conv1 -> 16 hidden, mu/logstd -> 8

    x = jax.random.normal(k_x, (num_nodes, in_channels), jnp.float32)

    # Deterministic graph: bidirectional ring.
    src = jnp.arange(num_nodes, dtype=jnp.int32)
    dst = (src + 1) % num_nodes
    edge_index = jnp.concatenate(
        [jnp.stack([src, dst]), jnp.stack([dst, src])], axis=1)        # (2, 2N)
    edge_weight = jax.random.uniform(
        k_ew, (edge_index.shape[1],), jnp.float32, 0.5, 1.5)

    params = init_params(k_w, in_channels, out_channels)

    # Fully-fused small-graph path.
    mu, logstd = variational_gcn_encoder(params, x, edge_index, edge_weight)
    jax.block_until_ready((mu, logstd))

    # Tiled path (forced) — exercises the gridded fused-propagation kernels.
    mu_t, logstd_t = variational_gcn_encoder(
        params, x, edge_index, edge_weight, fuse_threshold=0)
    jax.block_until_ready((mu_t, logstd_t))

    # Pure-JAX f32 reference (bf16 MXU inputs -> loosened tolerance).
    mu_ref, ls_ref = reference_encoder(params, x, edge_index, edge_weight, num_nodes)

    assert mu.shape == (num_nodes, out_channels)
    assert logstd.shape == (num_nodes, out_channels)
    assert jnp.allclose(mu, mu_ref, atol=5e-2, rtol=5e-2), "mu mismatch (fused)"
    assert jnp.allclose(logstd, ls_ref, atol=5e-2, rtol=5e-2), "logstd mismatch (fused)"
    assert jnp.allclose(mu_t, mu_ref, atol=5e-2, rtol=5e-2), "mu mismatch (tiled)"
    assert jnp.allclose(logstd_t, ls_ref, atol=5e-2, rtol=5e-2), "logstd mismatch (tiled)"

    print("KERNEL_OK")
</pallas_src>

<mosaic_0001>
module attributes {stable_mosaic.version = 11 : i64} {
  func.func @_fused_encoder_kernel(%arg0: memref<16x16xbf16, #tpu.memory_space<vmem>>, %arg1: memref<16x8xbf16, #tpu.memory_space<vmem>>, %arg2: memref<16x1xf32, #tpu.memory_space<vmem>>, %arg3: memref<8x128xbf16, #tpu.memory_space<vmem>>, %arg4: memref<1x128xf32, #tpu.memory_space<vmem>>, %arg5: memref<128x128xbf16, #tpu.memory_space<vmem>>, %arg6: memref<1x128xf32, #tpu.memory_space<vmem>>, %arg7: memref<16x128xf32, #tpu.memory_space<vmem>>) attributes {dimension_semantics = [], scalar_prefetch = 0 : i64, scratch_operands = 0 : i64, tpu.core_type = #tpu.core_type<tc>} {
    %c0 = arith.constant 0 : index
    %c0_0 = arith.constant 0 : index
    %0 = vector.load %arg2[%c0, %c0_0] : memref<16x1xf32, #tpu.memory_space<vmem>>, vector<16x1xf32>
    %c0_1 = arith.constant 0 : index
    %c0_2 = arith.constant 0 : index
    %1 = vector.load %arg1[%c0_1, %c0_2] : memref<16x8xbf16, #tpu.memory_space<vmem>>, vector<16x8xbf16>
    %c0_3 = arith.constant 0 : index
    %c0_4 = arith.constant 0 : index
    %2 = vector.load %arg3[%c0_3, %c0_4] : memref<8x128xbf16, #tpu.memory_space<vmem>>, vector<8x128xbf16>
    %cst = arith.constant dense<0.000000e+00> : vector<16x128xf32>
    %3 = tpu.matmul %1, %2, %cst {dimension_numbers = #tpu.dot_dimension_numbers<[1], [0], [0], [1], [0, 0, 1, 1], [], []>} : vector<16x8xbf16>, vector<8x128xbf16>, vector<16x128xf32> -> vector<16x128xf32>
    %4 = vector.broadcast %0 : vector<16x1xf32> to vector<16x128xf32>
    %5 = arith.mulf %3, %4 : vector<16x128xf32>
    %c0_5 = arith.constant 0 : index
    %c0_6 = arith.constant 0 : index
    %6 = vector.load %arg0[%c0_5, %c0_6] : memref<16x16xbf16, #tpu.memory_space<vmem>>, vector<16x16xbf16>
    %7 = arith.truncf %5 : vector<16x128xf32> to vector<16x128xbf16>
    %cst_7 = arith.constant dense<0.000000e+00> : vector<16x128xf32>
    %8 = tpu.matmul %6, %7, %cst_7 {dimension_numbers = #tpu.dot_dimension_numbers<[1], [0], [0], [1], [0, 0, 1, 1], [], []>} : vector<16x16xbf16>, vector<16x128xbf16>, vector<16x128xf32> -> vector<16x128xf32>
    %9 = vector.broadcast %0 : vector<16x1xf32> to vector<16x128xf32>
    %10 = arith.mulf %8, %9 : vector<16x128xf32>
    %c0_8 = arith.constant 0 : index
    %c0_9 = arith.constant 0 : index
    %11 = vector.load %arg4[%c0_8, %c0_9] : memref<1x128xf32, #tpu.memory_space<vmem>>, vector<1x128xf32>
    %12 = vector.broadcast %11 : vector<1x128xf32> to vector<16x128xf32>
    %13 = arith.addf %10, %12 : vector<16x128xf32>
    %cst_10 = arith.constant 0.000000e+00 : f32
    %14 = vector.broadcast %cst_10 : f32 to vector<16x128xf32>
    %15 = arith.maximumf %13, %14 : vector<16x128xf32>
    %16 = arith.truncf %15 : vector<16x128xf32> to vector<16x128xbf16>
    %c0_11 = arith.constant 0 : index
    %c0_12 = arith.constant 0 : index
    %17 = vector.load %arg5[%c0_11, %c0_12] : memref<128x128xbf16, #tpu.memory_space<vmem>>, vector<128x128xbf16>
    %cst_13 = arith.constant dense<0.000000e+00> : vector<16x128xf32>
    %18 = tpu.matmul %16, %17, %cst_13 {dimension_numbers = #tpu.dot_dimension_numbers<[1], [0], [0], [1], [0, 0, 1, 1], [], []>} : vector<16x128xbf16>, vector<128x128xbf16>, vector<16x128xf32> -> vector<16x128xf32>
    %19 = vector.broadcast %0 : vector<16x1xf32> to vector<16x128xf32>
    %20 = arith.mulf %18, %19 : vector<16x128xf32>
    %c0_14 = arith.constant 0 : index
    %c0_15 = arith.constant 0 : index
    %21 = vector.load %arg0[%c0_14, %c0_15] : memref<16x16xbf16, #tpu.memory_space<vmem>>, vector<16x16xbf16>
    %22 = arith.truncf %20 : vector<16x128xf32> to vector<16x128xbf16>
    %cst_16 = arith.constant dense<0.000000e+00> : vector<16x128xf32>
    %23 = tpu.matmul %21, %22, %cst_16 {dimension_numbers = #tpu.dot_dimension_numbers<[1], [0], [0], [1], [0, 0, 1, 1], [], []>} : vector<16x16xbf16>, vector<16x128xbf16>, vector<16x128xf32> -> vector<16x128xf32>
    %24 = vector.broadcast %0 : vector<16x1xf32> to vector<16x128xf32>
    %25 = arith.mulf %23, %24 : vector<16x128xf32>
    %c0_17 = arith.constant 0 : index
    %c0_18 = arith.constant 0 : index
    %26 = vector.load %arg6[%c0_17, %c0_18] : memref<1x128xf32, #tpu.memory_space<vmem>>, vector<1x128xf32>
    %27 = vector.broadcast %26 : vector<1x128xf32> to vector<16x128xf32>
    %28 = arith.addf %25, %27 : vector<16x128xf32>
    %c0_19 = arith.constant 0 : index
    %c0_20 = arith.constant 0 : index
    %29 = vector.load %arg7[%c0_19, %c0_20] : memref<16x128xf32, #tpu.memory_space<vmem>>, vector<16x128xf32>
    tpu.vector_store %arg7[%c0_19, %c0_20], %28 {strides = array<i32>} : memref<16x128xf32, #tpu.memory_space<vmem>>, vector<16x128xf32>,
    return
  }
}

</mosaic_0001>

<llo_original>
// kernel: tpu_custom_call.1
$region0: #{tpu_custom_call.1}
  #allocation0 [shape = 'u32[]', space=smem, size = 0x4, offset = 0x4, fixed_abs, tag = 'smem constant byte address 0x4 - core index']
  #allocation1 [shape = 'u32[144,128]{1,0:T(1,128)}', space=vmem, size = 0x12000, scoped, tag = 'internal scratch']
  %s0 = inlined_call_operand.vmem [shape: bf16[16,16], index: 0, kind: input, shape index: {}]
  %s1 = inlined_call_operand.vmem [shape: bf16[16,8], index: 1, kind: input, shape index: {}]
  %s2 = inlined_call_operand.vmem [shape: f32[16,1], index: 2, kind: input, shape index: {}]
  %s3 = inlined_call_operand.vmem [shape: bf16[8,128], index: 3, kind: input, shape index: {}]
  %s4 = inlined_call_operand.vmem [shape: f32[1,128], index: 4, kind: input, shape index: {}]
  %s5 = inlined_call_operand.hbm [shape: bf16[128,128], index: 5, kind: input, shape index: {}]
  %s6 = inlined_call_operand.vmem [shape: f32[1,128], index: 6, kind: input, shape index: {}]
  %s7 = inlined_call_operand.hbm [shape: f32[16,128], index: 7, kind: output, shape index: {}]
  %s8 = sld [smem:[#allocation0]]
  $region42: #{tpu_custom_call.1} parent=0
    _
  %s10 = ssub.s32 1, %s8
  %s11 = scalar_select 0, %s10, %s8
  $region1: #{tpu_custom_call.1} parent=0
    #allocation2 [shape = 'u8[32768]{0}', space=vmem, size = 0x8000, scoped, tag = 'input window, operand 5, single buffered']
    #allocation3 [shape = 's32[1]{0}', space=sflag, size = 0x4, scoped, tag = 'scoped memory for tpu_custom_call.1']
    #allocation4 [shape = 's32[1]{0}', space=sflag, size = 0x4, scoped, tag = 'scoped memory for tpu_custom_call.1']
    #allocation5 [shape = 'u8[8192]{0}', space=vmem, size = 0x2000, scoped, tag = 'output window, operand 0, single buffered']
    %12 = vsyncpa [#allocation3], 0
    %13 = vsyncpa [#allocation4], 0
    // Predicated region
    $region2: #{tpu_custom_call.1} parent=1 // pred_check
      _
    $region3: #{tpu_custom_call.1} parent=1 // pred_check_branch
      %15 = sbr.rel (0) target = $region5
    $region4: #{tpu_custom_call.1} parent=1 // pred_region
      _
    $region5: #{tpu_custom_call.1} parent=1 // pred_fallthru
      _
    // Predicated region
    $region6: #{tpu_custom_call.1} parent=1 // pred_check
      _
    $region7: #{tpu_custom_call.1} parent=1 // pred_check_branch
      %17 = sbr.rel (0) target = $region9
    $region8: #{tpu_custom_call.1} parent=1 // pred_region
      _
    $region9: #{tpu_custom_call.1} parent=1 // pred_fallthru
      _
    // Predicated region
    $region10: #{tpu_custom_call.1} parent=1 // pred_check
      _
    $region11: #{tpu_custom_call.1} parent=1 // pred_check_branch
      %19 = sbr.rel (0) target = $region13
    $region12: #{tpu_custom_call.1} parent=1 // pred_region
      _
    $region13: #{tpu_custom_call.1} parent=1 // pred_fallthru
      _
    // Predicated region
    $region14: #{tpu_custom_call.1} parent=1 // pred_check
      _
    $region15: #{tpu_custom_call.1} parent=1 // pred_check_branch
      %21 = sbr.rel (0) target = $region17
    $region16: #{tpu_custom_call.1} parent=1 // pred_region
      _
    $region17: #{tpu_custom_call.1} parent=1 // pred_fallthru
      _
    // Predicated region
    $region18: #{tpu_custom_call.1} parent=1 // pred_check
      _
    $region19: #{tpu_custom_call.1} parent=1 // pred_check_branch
      %23 = sbr.rel (0) target = $region21
    $region20: #{tpu_custom_call.1} parent=1 // pred_region
      _
    $region21: #{tpu_custom_call.1} parent=1 // pred_fallthru
      _
    // Predicated region
    $region22: #{tpu_custom_call.1} parent=1 // pred_check
      _
    $region23: #{tpu_custom_call.1} parent=1 // pred_check_branch
      %25 = sbr.rel (0) target = $region25
    $region24: #{tpu_custom_call.1} parent=1 // pred_region
      %s27 = ssub.s32 1024, 1024
      %28 = vsyncadd [#allocation3], %s27
      %s29 = sshll.u32 [#allocation2], 4
      %s30 = int_to_ptr.vmem [resolvable:$true] %s29
      %35 = dma.hbm_to_vmem [thread:$0]  %s5, 1024, %s30, [#allocation3], 64, 64, 4
    $region25: #{tpu_custom_call.1} parent=1 // pred_fallthru
      _
    // Predicated region
    $region26: #{tpu_custom_call.1} parent=1 // pred_check
      _
    $region27: #{tpu_custom_call.1} parent=1 // pred_check_branch
      %37 = sbr.rel (0) target = $region29
    $region28: #{tpu_custom_call.1} parent=1 // pred_region
      _
    $region29: #{tpu_custom_call.1} parent=1 // pred_fallthru
      _
    // Predicated region
    $region30: #{tpu_custom_call.1} parent=1 // pred_check
      _
    $region31: #{tpu_custom_call.1} parent=1 // pred_check_branch
      %39 = sbr.rel (0) target = $region33
    $region32: #{tpu_custom_call.1} parent=1 // pred_region
      %40 = dma.done [#allocation3], 1024
    $region33: #{tpu_custom_call.1} parent=1 // pred_fallthru
      _
    %v42 = vld [vmem:[%s2] sm:$0xff]
    %v43 = vld [vmem:[%s2 + $0x8] sm:$0xff]
    %v44 = vld [vmem:[%s1] sm:$0xf]
    %v45 = vld [vmem:[%s1 + $0x4] sm:$0xf]
    %v46 = vld [vmem:[%s3] sm:$0xf]
    %v49 = vunpack.c.l.b16 %v44
    %v50 = vunpack.c.l.b16 %v45
    %v51 = vpack.c.b16 %v50, %v49
    %vm52 = vcmask 64512
    %v54 = vsel %vm52, %v51, 0
    %vm56 = vcmask 1043456
    %v58 = vsel %vm56, %v46, 0
    %60 = vmatprep.subr.bf16.mxu0 0
    %61 = vmatpush1.bf16.msra.mxu0 %v58
    %62 = vmatprep.subr.bf16.mxu0 0
    %63 = vmatpush1.bf16.msra.mxu0 0
    %64 = vmatprep.subr.bf16.mxu0 0
    %65 = vmatpush1.bf16.msra.mxu0 0
    %66 = vmatprep.subr.bf16.mxu0 0
    %67 = vmatpush1.bf16.msra.mxu0 0
    %68 = vmatprep.subr.bf16.mxu0 0
    %69 = vmatpush1.bf16.msra.mxu0 0
    %70 = vmatprep.subr.bf16.mxu0 0
    %71 = vmatpush1.bf16.msra.mxu0 0
    %72 = vmatprep.subr.bf16.mxu0 0
    %73 = vmatpush1.bf16.msra.mxu0 0
    %74 = vmatprep.subr.bf16.mxu0 0
    %75 = vmatpush1.bf16.msra.mxu0 0
    %76 = vmatprep.subr.bf16.mxu0 0
    %77 = vmatpush1.bf16.msra.mxu0 0
    %78 = vmatprep.subr.bf16.mxu0 0
    %79 = vmatpush1.bf16.msra.mxu0 0
    %80 = vmatprep.subr.bf16.mxu0 0
    %81 = vmatpush1.bf16.msra.mxu0 0
    %82 = vmatprep.subr.bf16.mxu0 0
    %83 = vmatpush1.bf16.msra.mxu0 0
    %84 = vmatprep.subr.bf16.mxu0 0
    %85 = vmatpush1.bf16.msra.mxu0 0
    %86 = vmatprep.subr.bf16.mxu0 0
    %87 = vmatpush1.bf16.msra.mxu0 0
    %88 = vmatprep.subr.bf16.mxu0 0
    %89 = vmatpush1.bf16.msra.mxu0 0
    %90 = vmatprep.subr.bf16.mxu0 0
    %91 = vmatpush1.bf16.msra.mxu0 0
    %92 = vmatprep.mubr.bf16.mxu0 0
    %93 = vmatmul.mubr.bf16.gmra.mrb[0].mxu0 %v54
    %v94 = vpop.f32.mrb[0].mxu0
    %v95 = vadd.f32 0.0, %v94
    %v96 = vpop.f32.mrb[0].mxu0
    %v97 = vpop.f32.mrb[0].mxu0
    %v98 = vadd.f32 0.0, %v97
    %v99 = vpop.f32.mrb[0].mxu0
    %100 = vdwg.mxu0
    %102 = vset.pattern.permute.xlu0 0
    %103 = vperm.xlu0 %102, %v42
    %v104 = vpop.permute.xlu0 %103
    %107 = vset.pattern.permute.xlu0 0
    %108 = vperm.xlu0 %107, %v43
    %v109 = vpop.permute.xlu0 %108
    %v111 = vmul.f32 %v95, %v104
    %v112 = vmul.f32 %v98, %v109
    %v113 = vld [vmem:[%s0] sm:$0xf]
    %v114 = vld [vmem:[%s0 + $0x4] sm:$0xf]
    %v115 = vpack.c.bf16 %v112, %v111
    %v118 = vunpack.c.l.b16 %v113
    %v119 = vunpack.c.l.b16 %v114
    %v120 = vpack.c.b16 %v119, %v118
    %vm121 = vcmask 130048
    %v123 = vsel %vm121, %v120, 0
    %125 = vmatprep.subr.bf16.mxu0 0
    %126 = vmatpush1.bf16.msra.mxu0 %v115
    %127 = vmatprep.subr.bf16.mxu0 0
    %128 = vmatpush1.bf16.msra.mxu0 0
    %129 = vmatprep.subr.bf16.mxu0 0
    %130 = vmatpush1.bf16.msra.mxu0 0
    %131 = vmatprep.subr.bf16.mxu0 0
    %132 = vmatpush1.bf16.msra.mxu0 0
    %133 = vmatprep.subr.bf16.mxu0 0
    %134 = vmatpush1.bf16.msra.mxu0 0
    %135 = vmatprep.subr.bf16.mxu0 0
    %136 = vmatpush1.bf16.msra.mxu0 0
    %137 = vmatprep.subr.bf16.mxu0 0
    %138 = vmatpush1.bf16.msra.mxu0 0
    %139 = vmatprep.subr.bf16.mxu0 0
    %140 = vmatpush1.bf16.msra.mxu0 0
    %141 = vmatprep.subr.bf16.mxu0 0
    %142 = vmatpush1.bf16.msra.mxu0 0
    %143 = vmatprep.subr.bf16.mxu0 0
    %144 = vmatpush1.bf16.msra.mxu0 0
    %145 = vmatprep.subr.bf16.mxu0 0
    %146 = vmatpush1.bf16.msra.mxu0 0
    %147 = vmatprep.subr.bf16.mxu0 0
    %148 = vmatpush1.bf16.msra.mxu0 0
    %149 = vmatprep.subr.bf16.mxu0 0
    %150 = vmatpush1.bf16.msra.mxu0 0
    %151 = vmatprep.subr.bf16.mxu0 0
    %152 = vmatpush1.bf16.msra.mxu0 0
    %153 = vmatprep.subr.bf16.mxu0 0
    %154 = vmatpush1.bf16.msra.mxu0 0
    %155 = vmatprep.subr.bf16.mxu0 0
    %156 = vmatpush1.bf16.msra.mxu0 0
    %157 = vmatprep.mubr.bf16.mxu0 0
    %158 = vmatmul.mubr.bf16.gmra.mrb[0].mxu0 %v123
    %v159 = vpop.f32.mrb[0].mxu0
    %v160 = vadd.f32 0.0, %v159
    %v161 = vpop.f32.mrb[0].mxu0
    %v162 = vpop.f32.mrb[0].mxu0
    %v163 = vadd.f32 0.0, %v162
    %v164 = vpop.f32.mrb[0].mxu0
    %165 = vdwg.mxu0
    %v166 = vmul.f32 %v160, %v104
    %v167 = vmul.f32 %v163, %v109
    %v168 = vld [vmem:[%s4] sm:$0x1]
    %v170 = vlaneseq
    %v171 = vshrl.u32 %v170, 7
    %v172 = vsub.s32 0, %v171
    %v173 = vrot.slane %v168, %v172
    %v175 = vadd.f32 %v166, %v173
    %v176 = vadd.f32 %v167, %v173
    %v177 = vmax.f32 %v175, 0.0
    %v178 = vmax.f32 %v176, 0.0
    %v179 = vpack.c.bf16 %v178, %v177
    %v180 = vld [vmem:[#allocation2] sm:$0xf]
    %v181 = vld [vmem:[#allocation2 + $0x4] sm:$0xf]
    %v182 = vld [vmem:[#allocation2 + $0x8] sm:$0xf]
    %v183 = vld [vmem:[#allocation2 + $0xc] sm:$0xf]
    %v184 = vld [vmem:[#allocation2 + $0x10] sm:$0xf]
    %v185 = vld [vmem:[#allocation2 + $0x14] sm:$0xf]
    %v186 = vld [vmem:[#allocation2 + $0x18] sm:$0xf]
    %v187 = vld [vmem:[#allocation2 + $0x1c] sm:$0xf]
    %v188 = vld [vmem:[#allocation2 + $0x20] sm:$0xf]
    %v189 = vld [vmem:[#allocation2 + $0x24] sm:$0xf]
    %v190 = vld [vmem:[#allocation2 + $0x28] sm:$0xf]
    %v191 = vld [vmem:[#allocation2 + $0x2c] sm:$0xf]
    %v192 = vld [vmem:[#allocation2 + $0x30] sm:$0xf]
    %v193 = vld [vmem:[#allocation2 + $0x34] sm:$0xf]
    %v194 = vld [vmem:[#allocation2 + $0x38] sm:$0xf]
    %v195 = vld [vmem:[#allocation2 + $0x3c] sm:$0xf]
    %v212 = vunpack.c.l.b16 %v180
    %v213 = vunpack.c.l.b16 %v181
    %v214 = vunpack.c.l.b16 %v182
    %v215 = vunpack.c.l.b16 %v183
    %v216 = vunpack.c.l.b16 %v184
    %v217 = vunpack.c.l.b16 %v185
    %v218 = vunpack.c.l.b16 %v186
    %v219 = vunpack.c.l.b16 %v187
    %v220 = vunpack.c.l.b16 %v188
    %v221 = vunpack.c.l.b16 %v189
    %v222 = vunpack.c.l.b16 %v190
    %v223 = vunpack.c.l.b16 %v191
    %v224 = vunpack.c.l.b16 %v192
    %v225 = vunpack.c.l.b16 %v193
    %v226 = vunpack.c.l.b16 %v194
    %v227 = vunpack.c.l.b16 %v195
    %v228 = vpack.c.b16 %v213, %v212
    %v229 = vpack.c.b16 %v215, %v214
    %v230 = vpack.c.b16 %v217, %v216
    %v231 = vpack.c.b16 %v219, %v218
    %v232 = vpack.c.b16 %v221, %v220
    %v233 = vpack.c.b16 %v223, %v222
    %v234 = vpack.c.b16 %v225, %v224
    %v235 = vpack.c.b16 %v227, %v226
    %244 = vmatprep.subr.bf16.mxu0 0
    %245 = vmatpush1.bf16.msra.mxu0 %v228
    %246 = vmatprep.subr.bf16.mxu0 0
    %247 = vmatpush1.bf16.msra.mxu0 %v229
    %248 = vmatprep.subr.bf16.mxu0 0
    %249 = vmatpush1.bf16.msra.mxu0 %v230
    %250 = vmatprep.subr.bf16.mxu0 0
    %251 = vmatpush1.bf16.msra.mxu0 %v231
    %252 = vmatprep.subr.bf16.mxu0 0
    %253 = vmatpush1.bf16.msra.mxu0 %v232
    %254 = vmatprep.subr.bf16.mxu0 0
    %255 = vmatpush1.bf16.msra.mxu0 %v233
    %256 = vmatprep.subr.bf16.mxu0 0
    %257 = vmatpush1.bf16.msra.mxu0 %v234
    %258 = vmatprep.subr.bf16.mxu0 0
    %259 = vmatpush1.bf16.msra.mxu0 %v235
    %260 = vmatprep.subr.bf16.mxu0 0
    %261 = vmatpush1.bf16.msra.mxu0 0
    %262 = vmatprep.subr.bf16.mxu0 0
    %263 = vmatpush1.bf16.msra.mxu0 0
    %264 = vmatprep.subr.bf16.mxu0 0
    %265 = vmatpush1.bf16.msra.mxu0 0
    %266 = vmatprep.subr.bf16.mxu0 0
    %267 = vmatpush1.bf16.msra.mxu0 0
    %268 = vmatprep.subr.bf16.mxu0 0
    %269 = vmatpush1.bf16.msra.mxu0 0
    %270 = vmatprep.subr.bf16.mxu0 0
    %271 = vmatpush1.bf16.msra.mxu0 0
    %272 = vmatprep.subr.bf16.mxu0 0
    %273 = vmatpush1.bf16.msra.mxu0 0
    %274 = vmatprep.subr.bf16.mxu0 0
    %275 = vmatpush1.bf16.msra.mxu0 0
    %276 = vmatprep.mubr.bf16.mxu0 0
    %277 = vmatmul.mubr.bf16.gmra.mrb[0].mxu0 %v179
    %v278 = vpop.f32.mrb[0].mxu0
    %v279 = vadd.f32 0.0, %v278
    %v280 = vpop.f32.mrb[0].mxu0
    %v281 = vpop.f32.mrb[0].mxu0
    %v282 = vadd.f32 0.0, %v281
    %v283 = vpop.f32.mrb[0].mxu0
    %284 = vdwg.mxu0
    %v285 = vmul.f32 %v279, %v104
    %v286 = vmul.f32 %v282, %v109
    %v287 = vpack.c.bf16 %v286, %v285
    %288 = vmatprep.subr.bf16.mxu0 0
    %289 = vmatpush1.bf16.msra.mxu0 %v287
    %290 = vmatprep.subr.bf16.mxu0 0
    %291 = vmatpush1.bf16.msra.mxu0 0
    %292 = vmatprep.subr.bf16.mxu0 0
    %293 = vmatpush1.bf16.msra.mxu0 0
    %294 = vmatprep.subr.bf16.mxu0 0
    %295 = vmatpush1.bf16.msra.mxu0 0
    %296 = vmatprep.subr.bf16.mxu0 0
    %297 = vmatpush1.bf16.msra.mxu0 0
    %298 = vmatprep.subr.bf16.mxu0 0
    %299 = vmatpush1.bf16.msra.mxu0 0
    %300 = vmatprep.subr.bf16.mxu0 0
    %301 = vmatpush1.bf16.msra.mxu0 0
    %302 = vmatprep.subr.bf16.mxu0 0
    %303 = vmatpush1.bf16.msra.mxu0 0
    %304 = vmatprep.subr.bf16.mxu0 0
    %305 = vmatpush1.bf16.msra.mxu0 0
    %306 = vmatprep.subr.bf16.mxu0 0
    %307 = vmatpush1.bf16.msra.mxu0 0
    %308 = vmatprep.subr.bf16.mxu0 0
    %309 = vmatpush1.bf16.msra.mxu0 0
    %310 = vmatprep.subr.bf16.mxu0 0
    %311 = vmatpush1.bf16.msra.mxu0 0
    %312 = vmatprep.subr.bf16.mxu0 0
    %313 = vmatpush1.bf16.msra.mxu0 0
    %314 = vmatprep.subr.bf16.mxu0 0
    %315 = vmatpush1.bf16.msra.mxu0 0
    %316 = vmatprep.subr.bf16.mxu0 0
    %317 = vmatpush1.bf16.msra.mxu0 0
    %318 = vmatprep.subr.bf16.mxu0 0
    %319 = vmatpush1.bf16.msra.mxu0 0
    %320 = vmatprep.mubr.bf16.mxu0 0
    %321 = vmatmul.mubr.bf16.gmra.mrb[0].mxu0 %v123
    %v322 = vpop.f32.mrb[0].mxu0
    %v323 = vadd.f32 0.0, %v322
    %v324 = vpop.f32.mrb[0].mxu0
    %v325 = vpop.f32.mrb[0].mxu0
    %v326 = vadd.f32 0.0, %v325
    %v327 = vpop.f32.mrb[0].mxu0
    %328 = vdwg.mxu0
    %v329 = vmul.f32 %v323, %v104
    %v330 = vmul.f32 %v326, %v109
    %v331 = vld [vmem:[%s6] sm:$0x1]
    %v333 = vlaneseq
    %v334 = vshrl.u32 %v333, 7
    %v335 = vsub.s32 0, %v334
    %v336 = vrot.slane %v331, %v335
    %v338 = vadd.f32 %v329, %v336
    %v339 = vadd.f32 %v330, %v336
    %340 = vst [vmem:[#allocation5] sm:$0xff] %v338
    %341 = vst [vmem:[#allocation5 + $0x8] sm:$0xff] %v339
    // Predicated region
    $region34: #{tpu_custom_call.1} parent=1 // pred_check
      _
    $region35: #{tpu_custom_call.1} parent=1 // pred_check_branch
      %343 = sbr.rel (0) target = $region37
    $region36: #{tpu_custom_call.1} parent=1 // pred_region
      %s345 = ssub.s32 256, 256
      %346 = vsyncadd [#allocation4], %s345
      %s347 = sshll.u32 [#allocation5], 4
      %s348 = int_to_ptr.vmem [resolvable:$true] %s347
      %353 = dma.vmem_to_hbm [thread:$0]  %s348, 256, %s7, [#allocation4], 128, 128, 8
    $region37: #{tpu_custom_call.1} parent=1 // pred_fallthru
      _
    // Predicated region
    $region38: #{tpu_custom_call.1} parent=1 // pred_check
      _
    $region39: #{tpu_custom_call.1} parent=1 // pred_check_branch
      %355 = sbr.rel (0) target = $region41
    $region40: #{tpu_custom_call.1} parent=1 // pred_region
      %356 = dma.done [#allocation4], 256
    $region41: #{tpu_custom_call.1} parent=1 // pred_fallthru
      _
    %357 = vsyncpa [#allocation3], 1
    %358 = vsyncpa [#allocation4], 1

</llo_original>
